<compile_context>
chip_gen: v7x
topology: tpu7x:2x2x1
jax: 0.10.0
libtpu: 0.0.40
codegen_flags: <defaults>
</compile_context>

<pallas_src>
import functools

import jax
import jax.numpy as jnp
from jax import lax
from jax.experimental import pallas as pl
from jax.experimental.pallas import tpu as pltpu

_VMEM_LIMIT_BYTES = 64 * 1024 * 1024  # explicit cap: > v5e/v6e scoped defaults,
                                      # == v7x physical; actual use is ~12 MiB.


def _fit(dim, tile, align):
    """Largest multiple of `align` that divides `dim` and is <= `tile`.

    Falls back to the full dimension (always a legal block) only if no aligned
    divisor exists — never silently blows past the preferred tile otherwise.
    """
    if dim <= tile:
        return dim
    cand = (tile // align) * align
    while cand >= align:
        if dim % cand == 0:
            return cand
        cand -= align
    return dim  # e.g. prime dim; full-extent block (VMEM limit still applies)


# ---------------------------------------------------------------------------
# Stage 1: u = scaling * (x @ A^T)   — tiny (M, rank) intermediate.
# ---------------------------------------------------------------------------
def lora_a_kernel(x_ref, a_ref, u_ref, acc_ref, *, scaling):
    k = pl.program_id(1)

    @pl.when(k == 0)
    def _():
        acc_ref[...] = jnp.zeros_like(acc_ref)

    # (tm, tk) . (rank, tk) contracting dim 1 vs dim 1 == x_tile @ A_tile^T
    acc_ref[...] += lax.dot_general(
        x_ref[...], a_ref[...],
        dimension_numbers=(((1,), (1,)), ((), ())),
        preferred_element_type=jnp.float32)

    @pl.when(k == pl.num_programs(1) - 1)
    def _():
        # scaling applied exactly once per output tile (not per K step).
        u_ref[...] = (scaling * acc_ref[...]).astype(u_ref.dtype)


def _lora_a_proj(x, A, scaling, tm, tk):
    M, in_f = x.shape
    rank = A.shape[0]
    grid = (M // tm, in_f // tk)
    itemsize = jnp.dtype(x.dtype).itemsize

    kernel = functools.partial(lora_a_kernel, scaling=float(scaling))
    return pl.pallas_call(
        kernel,
        out_shape=jax.ShapeDtypeStruct((M, rank), x.dtype),
        grid_spec=pltpu.PrefetchScalarGridSpec(
            num_scalar_prefetch=0,
            grid=grid,
            in_specs=[
                pl.BlockSpec((tm, tk), lambda m, k: (m, k)),     # x
                pl.BlockSpec((rank, tk), lambda m, k: (0, k)),   # lora_A
            ],
            out_specs=pl.BlockSpec((tm, rank), lambda m, k: (m, 0)),
            scratch_shapes=[pltpu.VMEM((tm, rank), jnp.float32)],
        ),
        compiler_params=pltpu.CompilerParams(
            dimension_semantics=("parallel", "arbitrary"),
            vmem_limit_bytes=_VMEM_LIMIT_BYTES),
        cost_estimate=pl.CostEstimate(
            flops=2 * M * rank * in_f,
            transcendentals=0,
            bytes_accessed=itemsize * (x.size + A.size + M * rank)),
    )(x, A)


# ---------------------------------------------------------------------------
# Stage 2: y = x @ W^T + b + u @ B^T   — main tiled GEMM with f32 accumulator.
# ---------------------------------------------------------------------------
def lora_linear_kernel(x_ref, w_ref, b_ref, u_ref, bm_ref, o_ref, acc_ref):
    k = pl.program_id(2)

    @pl.when(k == 0)
    def _():
        acc_ref[...] = jnp.zeros_like(acc_ref)

    # Base GEMM: (tm, tk) . (tn, tk) contracting dim 1 vs dim 1 == x @ W^T tile,
    # f32-accumulated on the MXU, stored layouts (no transposes).
    acc_ref[...] += lax.dot_general(
        x_ref[...], w_ref[...],
        dimension_numbers=(((1,), (1,)), ((), ())),
        preferred_element_type=jnp.float32)

    # Finalize exactly once per (m, n) output tile: bias + LoRA B-projection.
    @pl.when(k == pl.num_programs(2) - 1)
    def _():
        lora = lax.dot_general(
            u_ref[...], bm_ref[...],
            dimension_numbers=(((1,), (1,)), ((), ())),
            preferred_element_type=jnp.float32)              # (tm, tn)
        o_ref[...] = (acc_ref[...] + b_ref[...] + lora).astype(o_ref.dtype)


def lora_linear(x, W, b, A, B, scaling, *, tm=512, tn=512, tk=1024):
    """y = x @ W^T + b + scaling * (x @ A^T) @ B^T  (LoRALinear.forward)."""
    M, in_f = x.shape
    out_f, _ = W.shape
    rank = A.shape[0]

    # MXU inputs in x's dtype (bf16 call sites get bf16 GEMMs); bias in f32 so
    # the add happens at accumulator precision.
    W = W.astype(x.dtype)
    A = A.astype(x.dtype)
    B = B.astype(x.dtype)
    b2d = b.astype(jnp.float32).reshape(1, out_f)

    # Hardware-aligned tile selection (sublane axis -> 8, lane axes -> 128).
    tm = _fit(M, tm, 8)
    tn = _fit(out_f, tn, 128)
    tk = _fit(in_f, tk, 128)
    grid = (M // tm, out_f // tn, in_f // tk)

    # Stage 1: tiny LoRA A-projection, decoupled from the main grid so N can be
    # parallel and no per-n ordering is required.
    u = _lora_a_proj(x, A, scaling, tm, tk)                  # (M, rank)

    itemsize = jnp.dtype(x.dtype).itemsize
    flops = 2 * M * out_f * (in_f + rank)
    bytes_accessed = itemsize * (x.size + W.size + B.size + M * rank
                                 + M * out_f) + 4 * out_f

    return pl.pallas_call(
        lora_linear_kernel,
        out_shape=jax.ShapeDtypeStruct((M, out_f), x.dtype),
        grid_spec=pltpu.PrefetchScalarGridSpec(
            num_scalar_prefetch=0,
            grid=grid,
            in_specs=[
                pl.BlockSpec((tm, tk), lambda m, n, k: (m, k)),     # x
                pl.BlockSpec((tn, tk), lambda m, n, k: (n, k)),     # W (out, in)
                pl.BlockSpec((1, tn), lambda m, n, k: (0, n)),      # bias (1, out)
                pl.BlockSpec((tm, rank), lambda m, n, k: (m, 0)),   # u = s*(x@A^T)
                pl.BlockSpec((tn, rank), lambda m, n, k: (n, 0)),   # lora_B
            ],
            out_specs=pl.BlockSpec((tm, tn), lambda m, n, k: (m, n)),
            scratch_shapes=[
                pltpu.VMEM((tm, tn), jnp.float32),   # f32 base accumulator
            ],
        ),
        compiler_params=pltpu.CompilerParams(
            dimension_semantics=("parallel", "parallel", "arbitrary"),
            vmem_limit_bytes=_VMEM_LIMIT_BYTES),
        cost_estimate=pl.CostEstimate(
            flops=flops, transcendentals=0, bytes_accessed=bytes_accessed),
    )(x, W, b2d, u, B)


def lora_linear_ref(x, W, b, A, B, scaling):
    xf = x.astype(jnp.float32)
    Wf = W.astype(jnp.float32)
    Af = A.astype(jnp.float32)
    Bf = B.astype(jnp.float32)
    base = xf @ Wf.T + b.astype(jnp.float32)
    lora = (xf @ Af.T) @ Bf.T * scaling
    return base + lora


if __name__ == "__main__":
    key = jax.random.PRNGKey(0)

    def check(batch, in_f, out_f, rank, alpha, dtype=jnp.float32,
              atol=1e-5, rtol=1e-5, **tiles):
        scaling = alpha / rank
        kx, kw, kb, ka, kB = jax.random.split(
            jax.random.fold_in(key, batch * 1000 + in_f), 5)
        x = jax.random.normal(kx, (batch, in_f), dtype=jnp.float32)
        # NOTE: the PyTorch module zero-inits lora_B (the LoRA branch starts as
        # a no-op); small random values are used so the LoRA path is exercised.
        W = jax.random.normal(kw, (out_f, in_f), dtype=jnp.float32) * 0.1
        b = jax.random.normal(kb, (out_f,), dtype=jnp.float32) * 0.1
        A = jax.random.normal(ka, (rank, in_f), dtype=jnp.float32) * 0.1
        B = jax.random.normal(kB, (out_f, rank), dtype=jnp.float32) * 0.1

        x, W, A, B = (t.astype(dtype) for t in (x, W, A, B))

        y = jax.block_until_ready(lora_linear(x, W, b, A, B, scaling, **tiles))
        y_ref = lora_linear_ref(x, W, b, A, B, scaling)
        assert y.shape == (batch, out_f)
        assert jnp.allclose(y.astype(jnp.float32), y_ref, atol=atol, rtol=rtol), (
            f"mismatch vs reference for ({batch},{in_f})->({out_f}) {dtype}")

    # Small shape consistent with the module (single grid step; out_f < 128 is
    # a test-only shape — real LoRA layers use lane-dense 128-multiple widths).
    check(batch=8, in_f=32, out_f=32, rank=4, alpha=1.0)

    # Multi-tile grid (2x2x2): exercises the f32 accumulator init/finalize and
    # the decoupled u-input path across parallel M and N tiles.
    check(batch=32, in_f=256, out_f=256, rank=4, alpha=1.0,
          tm=16, tn=128, tk=128)

    # bf16 call-site dtype (recommended on v6e/v7x): kernel still accumulates
    # in f32; looser tolerance only for the final bf16 output cast.
    check(batch=16, in_f=256, out_f=128, rank=8, alpha=16.0,
          dtype=jnp.bfloat16, atol=1e-1, rtol=5e-2)

    print("KERNEL_OK")
</pallas_src>

<mosaic_0001>
module attributes {stable_mosaic.version = 11 : i64} {
  func.func @lora_a_kernel(%arg0: i32, %arg1: i32, %arg2: memref<8x32xf32, #tpu.memory_space<vmem>>, %arg3: memref<4x32xf32, #tpu.memory_space<vmem>>, %arg4: memref<8x4xf32, #tpu.memory_space<vmem>>, %arg5: memref<8x4xf32, #tpu.memory_space<vmem>>) attributes {dimension_semantics = [#tpu.dimension_semantics<parallel>, #tpu.dimension_semantics<arbitrary>], iteration_bounds = array<i64: 1, 1>, scalar_prefetch = 0 : i64, scratch_operands = 1 : i64, tpu.core_type = #tpu.core_type<tc>, window_params = [{transform_indices = @transform_0, window_bounds = array<i64: 8, 32>}, {transform_indices = @transform_1, window_bounds = array<i64: 4, 32>}, {transform_indices = @transform_2, window_bounds = array<i64: 8, 4>}]} {
    %c0_i32 = arith.constant 0 : i32
    %0 = arith.cmpi eq, %arg1, %c0_i32 : i32
    %1 = arith.extui %0 : i1 to i32
    %c0_i32_0 = arith.constant 0 : i32
    %2 = arith.cmpi ne, %1, %c0_i32_0 : i32
    scf.if %2 {
      %cst_10 = arith.constant 0.000000e+00 : f32
      %12 = vector.broadcast %cst_10 : f32 to vector<8x4xf32>
      %c0_11 = arith.constant 0 : index
      %c0_12 = arith.constant 0 : index
      %13 = vector.load %arg5[%c0_11, %c0_12] : memref<8x4xf32, #tpu.memory_space<vmem>>, vector<8x4xf32>
      tpu.vector_store %arg5[%c0_11, %c0_12], %12 {strides = array<i32>} : memref<8x4xf32, #tpu.memory_space<vmem>>, vector<8x4xf32>,
    } else {
    }
    %c0 = arith.constant 0 : index
    %c0_1 = arith.constant 0 : index
    %3 = vector.load %arg5[%c0, %c0_1] : memref<8x4xf32, #tpu.memory_space<vmem>>, vector<8x4xf32>
    %c0_2 = arith.constant 0 : index
    %c0_3 = arith.constant 0 : index
    %4 = vector.load %arg2[%c0_2, %c0_3] : memref<8x32xf32, #tpu.memory_space<vmem>>, vector<8x32xf32>
    %c0_4 = arith.constant 0 : index
    %c0_5 = arith.constant 0 : index
    %5 = vector.load %arg3[%c0_4, %c0_5] : memref<4x32xf32, #tpu.memory_space<vmem>>, vector<4x32xf32>
    %cst = arith.constant dense<0.000000e+00> : vector<8x4xf32>
    %6 = tpu.matmul %4, %5, %cst {dimension_numbers = #tpu.dot_dimension_numbers<[1], [1], [0], [0], [0, 0, 1, 0], [], []>} : vector<8x32xf32>, vector<4x32xf32>, vector<8x4xf32> -> vector<8x4xf32>
    %7 = arith.addf %3, %6 : vector<8x4xf32>
    %c0_6 = arith.constant 0 : index
    %c0_7 = arith.constant 0 : index
    %8 = vector.load %arg5[%c0_6, %c0_7] : memref<8x4xf32, #tpu.memory_space<vmem>>, vector<8x4xf32>
    tpu.vector_store %arg5[%c0_6, %c0_7], %7 {strides = array<i32>} : memref<8x4xf32, #tpu.memory_space<vmem>>, vector<8x4xf32>,
    %c0_i32_8 = arith.constant 0 : i32
    %9 = arith.cmpi eq, %arg1, %c0_i32_8 : i32
    %10 = arith.extui %9 : i1 to i32
    %c0_i32_9 = arith.constant 0 : i32
    %11 = arith.cmpi ne, %10, %c0_i32_9 : i32
    scf.if %11 {
      %c0_10 = arith.constant 0 : index
      %c0_11 = arith.constant 0 : index
      %12 = vector.load %arg5[%c0_10, %c0_11] : memref<8x4xf32, #tpu.memory_space<vmem>>, vector<8x4xf32>
      %cst_12 = arith.constant 2.500000e-01 : f32
      %13 = vector.broadcast %cst_12 : f32 to vector<8x4xf32>
      %14 = arith.mulf %13, %12 : vector<8x4xf32>
      %c0_13 = arith.constant 0 : index
      %c0_14 = arith.constant 0 : index
      %15 = vector.load %arg4[%c0_13, %c0_14] : memref<8x4xf32, #tpu.memory_space<vmem>>, vector<8x4xf32>
      tpu.vector_store %arg4[%c0_13, %c0_14], %14 {strides = array<i32>} : memref<8x4xf32, #tpu.memory_space<vmem>>, vector<8x4xf32>,
    } else {
    }
    return
  }
  func.func @transform_0(%arg0: i32, %arg1: i32) -> (i32, i32) {
    %c0_i32 = arith.constant 0 : i32
    return %arg0, %arg1 : i32, i32
  }
  func.func @transform_1(%arg0: i32, %arg1: i32) -> (i32, i32) {
    %c0_i32 = arith.constant 0 : i32
    %c0_i32_0 = arith.constant 0 : i32
    return %c0_i32, %arg1 : i32, i32
  }
  func.func @transform_2(%arg0: i32, %arg1: i32) -> (i32, i32) {
    %c0_i32 = arith.constant 0 : i32
    %c0_i32_0 = arith.constant 0 : i32
    return %arg0, %c0_i32 : i32, i32
  }
}

</mosaic_0001>

<llo_original>
// kernel: tpu_custom_call.1
$region0: #{tpu_custom_call.1}
  #allocation0 [shape = 'u32[]', space=smem, size = 0x4, offset = 0x4, fixed_abs, tag = 'smem constant byte address 0x4 - core index']
  #allocation1 [shape = 'u32[144,128]{1,0:T(1,128)}', space=vmem, size = 0x12000, scoped, tag = 'internal scratch']
  #allocation2 [shape = 'f32[8,4]{1,0:T(8,128)}', space=vmem, size = 0x1000, scoped, tag = 'scratch operand']
  %s0 = inlined_call_operand.hbm [shape: f32[8,32], index: 0, kind: input, shape index: {}]
  %s1 = inlined_call_operand.hbm [shape: f32[4,32], index: 1, kind: input, shape index: {}]
  %s2 = inlined_call_operand.hbm [shape: f32[8,4], index: 2, kind: output, shape index: {}]
  %s3 = sld [smem:[#allocation0]]
  $region34: #{tpu_custom_call.1} parent=0
    _
  %s5 = ssub.s32 1, %s3
  %s6 = scalar_select 0, %s5, %s3
  $region1: #{tpu_custom_call.1} parent=0
    #allocation3 [shape = 'u8[4096]{0}', space=vmem, size = 0x1000, scoped, tag = 'input window, operand 0, single buffered']
    #allocation4 [shape = 's32[1]{0}', space=sflag, size = 0x4, scoped, tag = 'scoped memory for tpu_custom_call.1']
    #allocation5 [shape = 's32[1]{0}', space=sflag, size = 0x4, scoped, tag = 'scoped memory for tpu_custom_call.1']
    #allocation6 [shape = 'u8[2048]{0}', space=vmem, size = 0x800, scoped, tag = 'input window, operand 1, single buffered']
    #allocation7 [shape = 's32[1]{0}', space=sflag, size = 0x4, scoped, tag = 'scoped memory for tpu_custom_call.1']
    #allocation8 [shape = 'u8[4096]{0}', space=vmem, size = 0x1000, scoped, tag = 'output window, operand 0, single buffered']
    %7 = vsyncpa [#allocation4], 0
    %8 = vsyncpa [#allocation7], 0
    %9 = vsyncpa [#allocation5], 0
    // Predicated region
    $region2: #{tpu_custom_call.1} parent=1 // pred_check
      _
    $region3: #{tpu_custom_call.1} parent=1 // pred_check_branch
      %11 = sbr.rel (0) target = $region5
    $region4: #{tpu_custom_call.1} parent=1 // pred_region
      %s13 = ssub.s32 128, 128
      %14 = vsyncadd [#allocation4], %s13
      %s16 = sshll.u32 [#allocation3], 4
      %s17 = int_to_ptr.vmem [resolvable:$true] %s16
      %19 = dma.hbm_to_vmem [thread:$0]  %s0, 128, %s17, [#allocation4]
    $region5: #{tpu_custom_call.1} parent=1 // pred_fallthru
      _
    // Predicated region
    $region6: #{tpu_custom_call.1} parent=1 // pred_check
      _
    $region7: #{tpu_custom_call.1} parent=1 // pred_check_branch
      %21 = sbr.rel (0) target = $region9
    $region8: #{tpu_custom_call.1} parent=1 // pred_region
      %s23 = ssub.s32 64, 64
      %24 = vsyncadd [#allocation7], %s23
      %s26 = sshll.u32 [#allocation6], 4
      %s27 = int_to_ptr.vmem [resolvable:$true] %s26
      %29 = dma.hbm_to_vmem [thread:$0]  %s1, 64, %s27, [#allocation7]
    $region9: #{tpu_custom_call.1} parent=1 // pred_fallthru
      _
    // Predicated region
    $region10: #{tpu_custom_call.1} parent=1 // pred_check
      _
    $region11: #{tpu_custom_call.1} parent=1 // pred_check_branch
      %31 = sbr.rel (0) target = $region13
    $region12: #{tpu_custom_call.1} parent=1 // pred_region
      %32 = dma.done [#allocation4], 128
    $region13: #{tpu_custom_call.1} parent=1 // pred_fallthru
      _
    // Predicated region
    $region14: #{tpu_custom_call.1} parent=1 // pred_check
      _
    $region15: #{tpu_custom_call.1} parent=1 // pred_check_branch
      %34 = sbr.rel (0) target = $region17
    $region16: #{tpu_custom_call.1} parent=1 // pred_region
      %35 = dma.done [#allocation7], 64
    $region17: #{tpu_custom_call.1} parent=1 // pred_fallthru
      _
    %p36 = scmp.eq.s32.totalorder 0, 0
    // Predicated region
    $region18: #{tpu_custom_call.1} parent=1 // pred_check
      %p37 = pneg %p36
    $region19: #{tpu_custom_call.1} parent=1 // pred_check_branch
      %39 = sbr.rel (%p37) target = $region21
    $region20: #{tpu_custom_call.1} parent=1 // pred_region
      %vm40 = vcmask 31744
      %41 = vst.msk [vmem:[#allocation2] sm:$0xff] %vm40, 0.0
    $region21: #{tpu_custom_call.1} parent=1 // pred_fallthru
      _
    %v42 = vld [vmem:[#allocation2] sm:$0xff]
    %v43 = vld [vmem:[#allocation3] sm:$0xff]
    %v44 = vld [vmem:[#allocation6] sm:$0xf]
    %vm45 = vcmask 261120
    %v47 = vsel %vm45, %v43, 0
    %v50 = vsel %vm45, %v44, 0
    %52 = vmatprep.subr.mxu0 0.0
    %53 = vmatpush1.xpose.msra.mxu0 %v50
    %54 = vmatprep.subr.mxu0 0.0
    %55 = vmatpush1.xpose.msra.mxu0 0.0
    %56 = vmatprep.subr.mxu0 0.0
    %57 = vmatpush1.xpose.msra.mxu0 0.0
    %58 = vmatprep.subr.mxu0 0.0
    %59 = vmatpush1.xpose.msra.mxu0 0.0
    %60 = vmatprep.subr.mxu0 0.0
    %61 = vmatpush1.xpose.msra.mxu0 0.0
    %62 = vmatprep.subr.mxu0 0.0
    %63 = vmatpush1.xpose.msra.mxu0 0.0
    %64 = vmatprep.subr.mxu0 0.0
    %65 = vmatpush1.xpose.msra.mxu0 0.0
    %66 = vmatprep.subr.mxu0 0.0
    %67 = vmatpush1.xpose.msra.mxu0 0.0
    %68 = vmatprep.subr.mxu0 0.0
    %69 = vmatpush1.xpose.msra.mxu0 0.0
    %70 = vmatprep.subr.mxu0 0.0
    %71 = vmatpush1.xpose.msra.mxu0 0.0
    %72 = vmatprep.subr.mxu0 0.0
    %73 = vmatpush1.xpose.msra.mxu0 0.0
    %74 = vmatprep.subr.mxu0 0.0
    %75 = vmatpush1.xpose.msra.mxu0 0.0
    %76 = vmatprep.subr.mxu0 0.0
    %77 = vmatpush1.xpose.msra.mxu0 0.0
    %78 = vmatprep.subr.mxu0 0.0
    %79 = vmatpush1.xpose.msra.mxu0 0.0
    %80 = vmatprep.subr.mxu0 0.0
    %81 = vmatpush1.xpose.msra.mxu0 0.0
    %82 = vmatprep.subr.mxu0 0.0
    %83 = vmatpush1.xpose.msra.mxu0 0.0
    %84 = vmatprep.subr.mxu0 0.0
    %85 = vmatpush1.xpose.msra.mxu0 0.0
    %86 = vmatprep.subr.mxu0 0.0
    %87 = vmatpush1.xpose.msra.mxu0 0.0
    %88 = vmatprep.subr.mxu0 0.0
    %89 = vmatpush1.xpose.msra.mxu0 0.0
    %90 = vmatprep.subr.mxu0 0.0
    %91 = vmatpush1.xpose.msra.mxu0 0.0
    %92 = vmatprep.subr.mxu0 0.0
    %93 = vmatpush1.xpose.msra.mxu0 0.0
    %94 = vmatprep.subr.mxu0 0.0
    %95 = vmatpush1.xpose.msra.mxu0 0.0
    %96 = vmatprep.subr.mxu0 0.0
    %97 = vmatpush1.xpose.msra.mxu0 0.0
    %98 = vmatprep.subr.mxu0 0.0
    %99 = vmatpush1.xpose.msra.mxu0 0.0
    %100 = vmatprep.subr.mxu0 0.0
    %101 = vmatpush1.xpose.msra.mxu0 0.0
    %102 = vmatprep.subr.mxu0 0.0
    %103 = vmatpush1.xpose.msra.mxu0 0.0
    %104 = vmatprep.subr.mxu0 0.0
    %105 = vmatpush1.xpose.msra.mxu0 0.0
    %106 = vmatprep.subr.mxu0 0.0
    %107 = vmatpush1.xpose.msra.mxu0 0.0
    %108 = vmatprep.subr.mxu0 0.0
    %109 = vmatpush1.xpose.msra.mxu0 0.0
    %110 = vmatprep.subr.mxu0 0.0
    %111 = vmatpush1.xpose.msra.mxu0 0.0
    %112 = vmatprep.subr.mxu0 0.0
    %113 = vmatpush1.xpose.msra.mxu0 0.0
    %114 = vmatprep.subr.mxu0 0.0
    %115 = vmatpush1.xpose.msra.mxu0 0.0
    %116 = vmatprep.mubr.f32.mxu0 0.0
    %117 = vmatmul.mubr.f32.gmra.mrb[0].mxu0 %v47
    %v118 = vpop.f32.mrb[0].mxu0
    %v119 = vadd.f32 0.0, %v118
    %v120 = vpop.f32.mrb[0].mxu0
    %121 = vdwg.mxu0
    %v122 = vadd.f32 %v42, %v119
    %vm123 = vcmask 31744
    %124 = vst.msk [vmem:[#allocation2] sm:$0xff] %vm123, %v122
    // Predicated region
    $region22: #{tpu_custom_call.1} parent=1 // pred_check
      %p125 = pneg %p36
    $region23: #{tpu_custom_call.1} parent=1 // pred_check_branch
      %127 = sbr.rel (%p125) target = $region25
    $region24: #{tpu_custom_call.1} parent=1 // pred_region
      %v128 = vld [vmem:[#allocation2] sm:$0xff]
      %v129 = vmul.f32 %v128, 0.25
      %130 = vst.msk [vmem:[#allocation8] sm:$0xff] %vm123, %v129
    $region25: #{tpu_custom_call.1} parent=1 // pred_fallthru
      _
    // Predicated region
    $region26: #{tpu_custom_call.1} parent=1 // pred_check
      _
    $region27: #{tpu_custom_call.1} parent=1 // pred_check_branch
      %132 = sbr.rel (0) target = $region29
    $region28: #{tpu_custom_call.1} parent=1 // pred_region
      %s134 = ssub.s32 128, 128
      %135 = vsyncadd [#allocation5], %s134
      %s137 = sshll.u32 [#allocation8], 4
      %s138 = int_to_ptr.vmem [resolvable:$true] %s137
      %140 = dma.vmem_to_hbm [thread:$0]  %s138, 128, %s2, [#allocation5]
    $region29: #{tpu_custom_call.1} parent=1 // pred_fallthru
      _
    // Predicated region
    $region30: #{tpu_custom_call.1} parent=1 // pred_check
      _
    $region31: #{tpu_custom_call.1} parent=1 // pred_check_branch
      %142 = sbr.rel (0) target = $region33
    $region32: #{tpu_custom_call.1} parent=1 // pred_region
      %143 = dma.done [#allocation5], 128
    $region33: #{tpu_custom_call.1} parent=1 // pred_fallthru
      _
    %144 = vsyncpa [#allocation4], 1
    %145 = vsyncpa [#allocation7], 1
    %146 = vsyncpa [#allocation5], 1

</llo_original>
